<compile_context>
chip_gen: v6e
topology: v6e:2x2x1
jax: 0.10.0
libtpu: 0.0.40
codegen_flags: <defaults>
</compile_context>

<pallas_src>
import jax
import jax.numpy as jnp
from jax import lax
from jax.experimental import pallas as pl
from jax.experimental.pallas import tpu as pltpu


def _round_up(x: int, m: int) -> int:
    return ((x + m - 1) // m) * m


# ----------------------------- Pallas kernel --------------------------------
def _linear_probe_kernel(h_ref, w_ref, b_ref, o_ref):
    # h_ref: (block_m, feat_dim)   bf16   -- batch tile (pipelined over grid)
    # w_ref: (n_pad,   feat_dim)   bf16   -- nn.Linear layout, VMEM-resident
    # b_ref: (1, n_pad)            f32    -- VMEM-resident
    # o_ref: (block_m, n_pad)      f32
    #
    # NT-form matmul: contract the shared last (feat_dim) dim directly so the
    # MXU consumes W without any transpose.  f32 accumulation on the MXU.
    y = lax.dot_general(
        h_ref[...],
        w_ref[...],
        dimension_numbers=(((1,), (1,)), ((), ())),
        preferred_element_type=jnp.float32,
    )
    o_ref[...] = y + b_ref[...]


def linear_probe_fc(h, weight, bias, *, block_m=None):
    """Pallas implementation of nn.Linear(feat_dim, n_classes) applied to h.

    h:      (B, feat_dim)          any float dtype
    weight: (n_classes, feat_dim)  nn.Linear weight layout
    bias:   (n_classes,)
    returns (B, n_classes) float32
    """
    B, feat_dim = h.shape
    n_classes, feat_dim_w = weight.shape
    assert feat_dim == feat_dim_w

    # Lane-dense output: pad class dim to a multiple of 128 (zeros, sliced off).
    n_pad = _round_up(max(n_classes, 128), 128)

    # Batch tile: multiple of 8 sublanes; cap at 512 (big tiles amortize the
    # ~0.35us/step grid overhead; working set still tiny vs. scoped VMEM).
    if block_m is None:
        block_m = min(512, _round_up(B, 8))
    b_pad = _round_up(B, block_m)

    # bf16 operands (MXU peak, half the HBM bytes), f32 bias/accumulate.
    h_p = h.astype(jnp.bfloat16)
    if b_pad != B:
        h_p = jnp.pad(h_p, ((0, b_pad - B), (0, 0)))
    w_p = weight.astype(jnp.bfloat16)
    if n_pad != n_classes:
        w_p = jnp.pad(w_p, ((0, n_pad - n_classes), (0, 0)))
    b_p = bias.astype(jnp.float32)
    if n_pad != n_classes:
        b_p = jnp.pad(b_p, (0, n_pad - n_classes))
    b_p = b_p.reshape(1, n_pad)

    grid = (b_pad // block_m,)

    out = pl.pallas_call(
        _linear_probe_kernel,
        out_shape=jax.ShapeDtypeStruct((b_pad, n_pad), jnp.float32),
        grid=grid,
        in_specs=[
            # h: batch-tiled, pipelined over the grid.
            pl.BlockSpec((block_m, feat_dim), lambda i: (i, 0)),
            # W / bias: constant index_map -> DMA'd once, resident across grid.
            pl.BlockSpec((n_pad, feat_dim), lambda i: (0, 0)),
            pl.BlockSpec((1, n_pad), lambda i: (0, 0)),
        ],
        out_specs=pl.BlockSpec((block_m, n_pad), lambda i: (i, 0)),
        compiler_params=pltpu.CompilerParams(
            dimension_semantics=("parallel",)),
    )(h_p, w_p, b_p)

    return out[:B, :n_classes]


# --------------------------- frozen synthetic encoder ------------------------
def make_encoder_params(key, c_in, feat_dim):
    # Deterministic 1x1 conv weights (frozen, no grad in the reference).
    kw, kb = jax.random.split(key)
    w = jax.random.normal(kw, (feat_dim, c_in, 1, 1), jnp.float32) * 0.1
    b = jax.random.normal(kb, (feat_dim,), jnp.float32) * 0.01
    return w, b


def encoder_forward(x_nchw, conv_w, conv_b):
    # x: (B, C, H, W) NCHW, 1x1 conv, then global average pool -> (B, feat_dim)
    y = lax.conv_general_dilated(
        x_nchw, conv_w,
        window_strides=(1, 1), padding="VALID",
        dimension_numbers=("NCHW", "OIHW", "NCHW"),
    )
    y = y + conv_b[None, :, None, None]
    feats = jnp.mean(y, axis=(2, 3))            # (B, feat_dim)
    return feats.reshape(feats.shape[0], -1)    # .flatten(1)


# --------------------------------- module ------------------------------------
def linear_probe_forward(x, enc_params, fc_weight, fc_bias):
    # with torch.no_grad(): h = encoder(x).flatten(1)
    h = lax.stop_gradient(encoder_forward(x, *enc_params))
    # return self.fc(h)   -- Pallas kernel
    return linear_probe_fc(h, fc_weight, fc_bias)


if __name__ == "__main__":
    B, C, H, W = 2, 4, 16, 16
    feat_dim, n_classes = 32, 10

    key = jax.random.PRNGKey(0)
    k_x, k_enc, k_w, k_b = jax.random.split(key, 4)

    x = jax.random.normal(k_x, (B, C, H, W), jnp.float32)

    enc_params = make_encoder_params(k_enc, C, feat_dim)

    # nn.Linear(feat_dim, n_classes): weight (n_classes, feat_dim), bias (n_classes,)
    bound = 1.0 / jnp.sqrt(feat_dim)
    fc_weight = jax.random.uniform(k_w, (n_classes, feat_dim), jnp.float32, -bound, bound)
    fc_bias = jax.random.uniform(k_b, (n_classes,), jnp.float32, -bound, bound)

    out = linear_probe_forward(x, enc_params, fc_weight, fc_bias)
    out = jax.block_until_ready(out)

    # sanity check against plain-JAX f32 reference (bf16 operands -> looser tol)
    h_ref = encoder_forward(x, *enc_params)
    ref = h_ref @ fc_weight.T + fc_bias
    assert out.shape == (B, n_classes)
    assert jnp.allclose(out, ref, atol=1e-2, rtol=1e-2)

    print("KERNEL_OK")
</pallas_src>

<mosaic_0001>
module attributes {stable_mosaic.version = 11 : i64} {
  func.func @_linear_probe_kernel(%arg0: i32, %arg1: memref<8x32xbf16, #tpu.memory_space<vmem>>, %arg2: memref<128x32xbf16, #tpu.memory_space<vmem>>, %arg3: memref<1x128xf32, #tpu.memory_space<vmem>>, %arg4: memref<8x128xf32, #tpu.memory_space<vmem>>) attributes {dimension_semantics = [#tpu.dimension_semantics<parallel>], iteration_bounds = array<i64: 1>, scalar_prefetch = 0 : i64, scratch_operands = 0 : i64, tpu.core_type = #tpu.core_type<tc>, window_params = [{transform_indices = @transform_0, window_bounds = array<i64: 8, 32>}, {pipeline_mode = #tpu.pipeline_mode<synchronous>, transform_indices = @transform_1, window_bounds = array<i64: 128, 32>}, {pipeline_mode = #tpu.pipeline_mode<synchronous>, transform_indices = @transform_2, window_bounds = array<i64: 1, 128>}, {transform_indices = @transform_3, window_bounds = array<i64: 8, 128>}]} {
    %c0 = arith.constant 0 : index
    %c0_0 = arith.constant 0 : index
    %0 = vector.load %arg1[%c0, %c0_0] : memref<8x32xbf16, #tpu.memory_space<vmem>>, vector<8x32xbf16>
    %c0_1 = arith.constant 0 : index
    %c0_2 = arith.constant 0 : index
    %1 = vector.load %arg2[%c0_1, %c0_2] : memref<128x32xbf16, #tpu.memory_space<vmem>>, vector<128x32xbf16>
    %cst = arith.constant dense<0.000000e+00> : vector<8x128xf32>
    %2 = tpu.matmul %0, %1, %cst {dimension_numbers = #tpu.dot_dimension_numbers<[1], [1], [0], [0], [0, 0, 1, 0], [], []>} : vector<8x32xbf16>, vector<128x32xbf16>, vector<8x128xf32> -> vector<8x128xf32>
    %c0_3 = arith.constant 0 : index
    %c0_4 = arith.constant 0 : index
    %3 = vector.load %arg3[%c0_3, %c0_4] : memref<1x128xf32, #tpu.memory_space<vmem>>, vector<1x128xf32>
    %4 = vector.broadcast %3 : vector<1x128xf32> to vector<8x128xf32>
    %5 = arith.addf %2, %4 : vector<8x128xf32>
    %c0_5 = arith.constant 0 : index
    %c0_6 = arith.constant 0 : index
    %6 = vector.load %arg4[%c0_5, %c0_6] : memref<8x128xf32, #tpu.memory_space<vmem>>, vector<8x128xf32>
    tpu.vector_store %arg4[%c0_5, %c0_6], %5 {strides = array<i32>} : memref<8x128xf32, #tpu.memory_space<vmem>>, vector<8x128xf32>,
    return
  }
  func.func @transform_0(%arg0: i32) -> (i32, i32) {
    %c0_i32 = arith.constant 0 : i32
    %c0_i32_0 = arith.constant 0 : i32
    return %arg0, %c0_i32 : i32, i32
  }
  func.func @transform_1(%arg0: i32) -> (i32, i32) {
    %c0_i32 = arith.constant 0 : i32
    %c0_i32_0 = arith.constant 0 : i32
    %c0_i32_1 = arith.constant 0 : i32
    return %c0_i32, %c0_i32_0 : i32, i32
  }
  func.func @transform_2(%arg0: i32) -> (i32, i32) {
    %c0_i32 = arith.constant 0 : i32
    %c0_i32_0 = arith.constant 0 : i32
    %c0_i32_1 = arith.constant 0 : i32
    return %c0_i32, %c0_i32_0 : i32, i32
  }
  func.func @transform_3(%arg0: i32) -> (i32, i32) {
    %c0_i32 = arith.constant 0 : i32
    %c0_i32_0 = arith.constant 0 : i32
    return %arg0, %c0_i32 : i32, i32
  }
}

</mosaic_0001>

<llo_original>
// kernel: tpu_custom_call.1
$region0: #{tpu_custom_call.1}
  #allocation0 [shape = 'u32[]', space=smem, size = 0x4, offset = 0x4, fixed_abs, tag = 'smem constant byte address 0x4 - core index']
  #allocation1 [shape = 'u32[144,128]{1,0:T(1,128)}', space=vmem, size = 0x12000, scoped, tag = 'internal scratch']
  %s0 = inlined_call_operand.vmem [shape: bf16[8,32], index: 0, kind: input, shape index: {}]
  %s1 = inlined_call_operand.vmem [shape: bf16[128,32], index: 1, kind: input, shape index: {}]
  %s2 = inlined_call_operand.vmem [shape: f32[1,128], index: 2, kind: input, shape index: {}]
  %s3 = inlined_call_operand.hbm [shape: f32[8,128], index: 3, kind: output, shape index: {}]
  %s4 = sld [smem:[#allocation0]]
  $region22: #{tpu_custom_call.1} parent=0
    _
  %s6 = ssub.s32 1, %s4
  %s7 = scalar_select 0, %s6, %s4
  $region1: #{tpu_custom_call.1} parent=0
    #allocation2 [shape = 'u8[4096]{0}', space=vmem, size = 0x1000, scoped, tag = 'output window, operand 0, single buffered']
    #allocation3 [shape = 's32[1]{0}', space=sflag, size = 0x4, scoped, tag = 'scoped memory for tpu_custom_call.1']
    %8 = vsyncpa [#allocation3], 0
    // Predicated region
    $region2: #{tpu_custom_call.1} parent=1 // pred_check
      _
    $region3: #{tpu_custom_call.1} parent=1 // pred_check_branch
      %10 = sbr.rel (0) target = $region5
    $region4: #{tpu_custom_call.1} parent=1 // pred_region
      _
    $region5: #{tpu_custom_call.1} parent=1 // pred_fallthru
      _
    // Predicated region
    $region6: #{tpu_custom_call.1} parent=1 // pred_check
      _
    $region7: #{tpu_custom_call.1} parent=1 // pred_check_branch
      %12 = sbr.rel (0) target = $region9
    $region8: #{tpu_custom_call.1} parent=1 // pred_region
      _
    $region9: #{tpu_custom_call.1} parent=1 // pred_fallthru
      _
    // Predicated region
    $region10: #{tpu_custom_call.1} parent=1 // pred_check
      _
    $region11: #{tpu_custom_call.1} parent=1 // pred_check_branch
      %14 = sbr.rel (0) target = $region13
    $region12: #{tpu_custom_call.1} parent=1 // pred_region
      _
    $region13: #{tpu_custom_call.1} parent=1 // pred_fallthru
      _
    %v16 = vld [vmem:[%s0] sm:$0xf]
    %v17 = vld [vmem:[%s1] sm:$0xf]
    %v18 = vld [vmem:[%s1 + $0x4] sm:$0xf]
    %v19 = vld [vmem:[%s1 + $0x8] sm:$0xf]
    %v20 = vld [vmem:[%s1 + $0xc] sm:$0xf]
    %v21 = vld [vmem:[%s1 + $0x10] sm:$0xf]
    %v22 = vld [vmem:[%s1 + $0x14] sm:$0xf]
    %v23 = vld [vmem:[%s1 + $0x18] sm:$0xf]
    %v24 = vld [vmem:[%s1 + $0x1c] sm:$0xf]
    %v25 = vld [vmem:[%s1 + $0x20] sm:$0xf]
    %v26 = vld [vmem:[%s1 + $0x24] sm:$0xf]
    %v27 = vld [vmem:[%s1 + $0x28] sm:$0xf]
    %v28 = vld [vmem:[%s1 + $0x2c] sm:$0xf]
    %v29 = vld [vmem:[%s1 + $0x30] sm:$0xf]
    %v30 = vld [vmem:[%s1 + $0x34] sm:$0xf]
    %v31 = vld [vmem:[%s1 + $0x38] sm:$0xf]
    %v32 = vld [vmem:[%s1 + $0x3c] sm:$0xf]
    %v33 = vld [vmem:[%s2] sm:$0x1]
    %v35 = vlaneseq
    %v36 = vshrl.u32 %v35, 7
    %v37 = vsub.s32 0, %v36
    %v38 = vrot.slane %v33, %v37
    %v56 = vunpack.c.l.b16 %v17
    %v57 = vunpack.c.l.b16 %v18
    %v58 = vunpack.c.l.b16 %v19
    %v59 = vunpack.c.l.b16 %v20
    %v60 = vunpack.c.l.b16 %v21
    %v61 = vunpack.c.l.b16 %v22
    %v62 = vunpack.c.l.b16 %v23
    %v63 = vunpack.c.l.b16 %v24
    %v64 = vunpack.c.l.b16 %v25
    %v65 = vunpack.c.l.b16 %v26
    %v66 = vunpack.c.l.b16 %v27
    %v67 = vunpack.c.l.b16 %v28
    %v68 = vunpack.c.l.b16 %v29
    %v69 = vunpack.c.l.b16 %v30
    %v70 = vunpack.c.l.b16 %v31
    %v71 = vunpack.c.l.b16 %v32
    %v72 = vpack.c.b16 %v57, %v56
    %v73 = vpack.c.b16 %v59, %v58
    %v74 = vpack.c.b16 %v61, %v60
    %v75 = vpack.c.b16 %v63, %v62
    %v76 = vpack.c.b16 %v65, %v64
    %v77 = vpack.c.b16 %v67, %v66
    %v78 = vpack.c.b16 %v69, %v68
    %v79 = vpack.c.b16 %v71, %v70
    %vm80 = vcmask 261120
    %v82 = vsel %vm80, %v16, 0
    %v85 = vsel %vm80, %v72, 0
    %v88 = vsel %vm80, %v73, 0
    %v91 = vsel %vm80, %v74, 0
    %v94 = vsel %vm80, %v75, 0
    %v97 = vsel %vm80, %v76, 0
    %v100 = vsel %vm80, %v77, 0
    %v103 = vsel %vm80, %v78, 0
    %v106 = vsel %vm80, %v79, 0
    %108 = vmatprep.subr.bf16.mxu0 0
    %109 = vmatpush1.bf16.xpose.msra.mxu0 %v106
    %110 = vmatprep.subr.bf16.mxu0 0
    %111 = vmatpush1.bf16.xpose.msra.mxu0 %v103
    %112 = vmatprep.subr.bf16.mxu0 0
    %113 = vmatpush1.bf16.xpose.msra.mxu0 %v100
    %114 = vmatprep.subr.bf16.mxu0 0
    %115 = vmatpush1.bf16.xpose.msra.mxu0 %v97
    %116 = vmatprep.subr.bf16.mxu0 0
    %117 = vmatpush1.bf16.xpose.msra.mxu0 %v94
    %118 = vmatprep.subr.bf16.mxu0 0
    %119 = vmatpush1.bf16.xpose.msra.mxu0 %v91
    %120 = vmatprep.subr.bf16.mxu0 0
    %121 = vmatpush1.bf16.xpose.msra.mxu0 %v88
    %122 = vmatprep.subr.bf16.mxu0 0
    %123 = vmatpush1.bf16.xpose.msra.mxu0 %v85
    %124 = vmatprep.subr.bf16.mxu0 0
    %125 = vmatpush2.bf16.xpose.msra.mxu0 0
    %126 = vmatprep.subr.bf16.mxu0 0
    %127 = vmatpush2.bf16.xpose.msra.mxu0 0
    %128 = vmatprep.subr.bf16.mxu0 0
    %129 = vmatpush2.bf16.xpose.msra.mxu0 0
    %130 = vmatprep.subr.bf16.mxu0 0
    %131 = vmatpush2.bf16.xpose.msra.mxu0 0
    %132 = vmatprep.subr.bf16.mxu0 0
    %133 = vmatpush2.bf16.xpose.msra.mxu0 0
    %134 = vmatprep.subr.bf16.mxu0 0
    %135 = vmatpush2.bf16.xpose.msra.mxu0 0
    %136 = vmatprep.subr.bf16.mxu0 0
    %137 = vmatpush2.bf16.xpose.msra.mxu0 0
    %138 = vmatprep.subr.bf16.mxu0 0
    %139 = vmatpush2.bf16.xpose.msra.mxu0 0
    %140 = vmatprep.mubr.bf16.mxu0 0
    %141 = vmatmul.mubr.bf16.gmra.mxu0 %v82
    %v142 = vpop.f32.mrf.mxu0
    %v143 = vadd.f32 %v38, %v142
    %v144 = vpop.f32.mrf.mxu0
    %v145 = vpop.f32.mrf.mxu0
    %v146 = vpop.f32.mrf.mxu0
    %147 = vdwg.mxu0
    %148 = vst [vmem:[#allocation2] sm:$0xff] %v143
    // Predicated region
    $region14: #{tpu_custom_call.1} parent=1 // pred_check
      _
    $region15: #{tpu_custom_call.1} parent=1 // pred_check_branch
      %150 = sbr.rel (0) target = $region17
    $region16: #{tpu_custom_call.1} parent=1 // pred_region
      %s152 = ssub.s32 128, 128
      %153 = vsyncadd [#allocation3], %s152
      %s155 = sshll.u32 [#allocation2], 4
      %s156 = int_to_ptr.vmem [resolvable:$true] %s155
      %158 = dma.vmem_to_hbm [thread:$0]  %s156, 128, %s3, [#allocation3]
    $region17: #{tpu_custom_call.1} parent=1 // pred_fallthru
      _
    // Predicated region
    $region18: #{tpu_custom_call.1} parent=1 // pred_check
      _
    $region19: #{tpu_custom_call.1} parent=1 // pred_check_branch
      %160 = sbr.rel (0) target = $region21
    $region20: #{tpu_custom_call.1} parent=1 // pred_region
      %161 = dma.done [#allocation3], 128
    $region21: #{tpu_custom_call.1} parent=1 // pred_fallthru
      _
    %162 = vsyncpa [#allocation3], 1

</llo_original>
